<compile_context>
chip_gen: v7x
topology: tpu7x:2x2x1
jax: 0.10.0
libtpu: 0.0.40
codegen_flags: <defaults>
</compile_context>

<pallas_src>
import jax
import jax.numpy as jnp
from jax.experimental import pallas as pl
from jax.experimental.pallas import tpu as pltpu


def _round_up(a, b):
    return (a + b - 1) // b * b


def _causal_conv_glu_kernel(x_ref, wa_ref, wg_ref, ba_ref, bg_ref, out_ref, stack_ref):
    # x_ref    : (C_in_p, L_TILE + K - 1)   halo'd input tile (compute dtype)
    # wa/wg    : (CO_TILE, K * C_in_p)      folded weights, GLU "a" / gate half
    # ba/bg    : (CO_TILE, 1)               f32 bias tiles
    # out_ref  : (CO_TILE, L_TILE)
    # stack_ref: (K * C_in_p, L_TILE)       VMEM scratch, per-tile im2col stack
    l_tile = out_ref.shape[-1]
    c_in_p = x_ref.shape[0]
    k_taps = x_ref.shape[1] - l_tile + 1  # == K (static)

    # Build the stacked input: row block k holds the tile shifted left by k.
    # Destination sublane offsets are multiples of C_in_p (16-aligned).
    for k in range(k_taps):
        stack_ref[k * c_in_p:(k + 1) * c_in_p, :] = x_ref[:, k:k + l_tile]
    stack = stack_ref[...]

    # One deep contraction per GLU half (f32 accumulate on the MXU).
    a = jnp.dot(wa_ref[...], stack, preferred_element_type=jnp.float32)
    g = jnp.dot(wg_ref[...], stack, preferred_element_type=jnp.float32)
    a = a + ba_ref[...]
    g = g + bg_ref[...]
    out_ref[...] = (a * jax.nn.sigmoid(g)).astype(out_ref.dtype)


def causal_conv_glu(x, v, g, bias, *, kernel_size=3, padding=2,
                    l_tile=512, co_tile=256, compute_dtype=jnp.bfloat16):
    """x: (B, C_in, L); v: (2*C_out, C_in, K); g, bias: (2*C_out,) -> (B, C_out, L)."""
    B, C_in, L = x.shape
    two_cout, v_cin, K = v.shape
    assert v_cin == C_in
    assert K == kernel_size
    # The causal rewrite (conv(pad)[:, :, :-padding]) requires padding == K - 1.
    assert padding == kernel_size - 1, "causal rewrite assumes padding == kernel_size - 1"
    C_out = two_cout // 2
    out_dtype = x.dtype

    # ---- weight normalization (PyTorch weight_norm default dim=0), in f32 ----
    v32 = v.astype(jnp.float32)
    norm = jnp.sqrt(jnp.sum(v32 * v32, axis=(1, 2), keepdims=True))
    w = g.astype(jnp.float32)[:, None, None] * v32 / norm            # (2*C_out, C_in, K)

    # ---- padded / tiled sizes ----
    c_in_p = _round_up(C_in, 16)                   # sublane-aligned (also for bf16 packing)
    l_t = min(l_tile, _round_up(L, 128))           # lane tile, multiple of 128
    L_pad = _round_up(L, l_t)
    n_lt = L_pad // l_t
    co8 = _round_up(C_out, 8)
    co_t = min(co_tile, co8)                       # output-channel tile (multiple of 8)
    C_out_p = _round_up(co8, co_t)
    n_co = C_out_p // co_t
    Lh = l_t + K - 1                               # tile width incl. K-1 left halo

    # ---- fold the K taps into the contraction: (C_out_p, K*C_in_p), per GLU half ----
    def fold(w_half, b_half):
        wp = jnp.pad(w_half, ((0, C_out_p - C_out), (0, c_in_p - C_in), (0, 0)))
        wp = jnp.transpose(wp, (0, 2, 1)).reshape(C_out_p, K * c_in_p)
        bp = jnp.pad(b_half, ((0, C_out_p - C_out),)).reshape(C_out_p, 1)
        return wp.astype(compute_dtype), bp.astype(jnp.float32)

    bias32 = bias.astype(jnp.float32)
    w_a, b_a = fold(w[:C_out], bias32[:C_out])
    w_g, b_g = fold(w[C_out:], bias32[C_out:])

    # ---- overlapping (halo'd) L tiles of x: (B, n_lt, C_in_p, Lh) ----
    xc = x.astype(compute_dtype)
    xp = jnp.pad(xc, ((0, 0), (0, c_in_p - C_in), (K - 1, L_pad - L)))
    col = (jnp.arange(n_lt) * l_t)[:, None] + jnp.arange(Lh)[None, :]
    x_tiles = jnp.transpose(xp[:, :, col], (0, 2, 1, 3))

    itemsize = jnp.dtype(compute_dtype).itemsize
    cost = pl.CostEstimate(
        flops=int(2 * B * (2 * C_out_p) * (K * c_in_p) * L_pad),
        transcendentals=int(B * C_out_p * L_pad),
        bytes_accessed=int(B * n_lt * c_in_p * Lh * itemsize
                           + 2 * C_out_p * K * c_in_p * itemsize
                           + 2 * C_out_p * 4
                           + B * C_out_p * L_pad * jnp.dtype(out_dtype).itemsize),
    )

    out_p = pl.pallas_call(
        _causal_conv_glu_kernel,
        out_shape=jax.ShapeDtypeStruct((B, C_out_p, L_pad), out_dtype),
        grid=(B, n_co, n_lt),
        in_specs=[
            # halo'd x tile: streamed along the fastest (L) axis
            pl.BlockSpec((None, None, c_in_p, Lh), lambda b, co, lt: (b, lt, 0, 0)),
            # folded weights / bias: constant along B and L -> stay VMEM-resident
            pl.BlockSpec((co_t, K * c_in_p), lambda b, co, lt: (co, 0)),
            pl.BlockSpec((co_t, K * c_in_p), lambda b, co, lt: (co, 0)),
            pl.BlockSpec((co_t, 1), lambda b, co, lt: (co, 0)),
            pl.BlockSpec((co_t, 1), lambda b, co, lt: (co, 0)),
        ],
        out_specs=pl.BlockSpec((None, co_t, l_t), lambda b, co, lt: (b, co, lt)),
        scratch_shapes=[pltpu.VMEM((K * c_in_p, l_t), compute_dtype)],
        compiler_params=pltpu.CompilerParams(
            dimension_semantics=("parallel", "parallel", "parallel"),
            vmem_limit_bytes=48 * 1024 * 1024,
        ),
        cost_estimate=cost,
    )(x_tiles, w_a, w_g, b_a, b_g)

    return out_p[:, :C_out, :L]


if __name__ == "__main__":
    B, C_in, C_out, L, K = 2, 4, 4, 16, 3

    key = jax.random.PRNGKey(0)
    k1, k2, k3, k4 = jax.random.split(key, 4)
    x = jax.random.normal(k1, (B, C_in, L), dtype=jnp.float32)
    v = jax.random.normal(k2, (2 * C_out, C_in, K), dtype=jnp.float32) * 0.5
    g = jax.random.normal(k3, (2 * C_out,), dtype=jnp.float32) + 1.0
    bias = jax.random.normal(k4, (2 * C_out,), dtype=jnp.float32) * 0.1

    out = jax.block_until_ready(
        causal_conv_glu(x, v, g, bias, kernel_size=K, padding=2)
    )
    assert out.shape == (B, C_out, L)

    # plain-JAX reference mirroring the PyTorch forward
    def ref_fn(x_in, w_in, b_in):
        y = jax.lax.conv_general_dilated(
            x_in, w_in, window_strides=(1,), padding=[(2, 2)],
            dimension_numbers=("NCH", "OIH", "NCH"),
        ) + b_in[None, :, None]
        y = y[:, :, :-2]
        a_half, g_half = jnp.split(y, 2, axis=1)
        return a_half * jax.nn.sigmoid(g_half)

    norm = jnp.sqrt(jnp.sum(v ** 2, axis=(1, 2), keepdims=True))
    w_full = g[:, None, None] * v / norm

    # exact-semantics check against the same bf16-rounded operands the MXU sees
    ref_bf16 = ref_fn(x.astype(jnp.bfloat16).astype(jnp.float32),
                      w_full.astype(jnp.bfloat16).astype(jnp.float32), bias)
    assert jnp.allclose(out, ref_bf16, atol=2e-3, rtol=2e-3)

    # looser check against the full-precision PyTorch-equivalent forward
    ref_f32 = ref_fn(x, w_full, bias)
    assert jnp.allclose(out, ref_f32, atol=0.15, rtol=0.1)

    print("KERNEL_OK")
</pallas_src>

<mosaic_0001>
module attributes {stable_mosaic.version = 11 : i64} {
  func.func @_causal_conv_glu_kernel(%arg0: i32, %arg1: i32, %arg2: i32, %arg3: memref<1x1x16x130xbf16, #tpu.memory_space<vmem>>, %arg4: memref<8x48xbf16, #tpu.memory_space<vmem>>, %arg5: memref<8x48xbf16, #tpu.memory_space<vmem>>, %arg6: memref<8x1xf32, #tpu.memory_space<vmem>>, %arg7: memref<8x1xf32, #tpu.memory_space<vmem>>, %arg8: memref<1x8x128xf32, #tpu.memory_space<vmem>>, %arg9: memref<48x128xbf16, #tpu.memory_space<vmem>>) attributes {dimension_semantics = [#tpu.dimension_semantics<parallel>, #tpu.dimension_semantics<parallel>, #tpu.dimension_semantics<parallel>], iteration_bounds = array<i64: 2, 1, 1>, scalar_prefetch = 0 : i64, scratch_operands = 1 : i64, tpu.core_type = #tpu.core_type<tc>, window_params = [{transform_indices = @transform_0, window_bounds = array<i64: 1, 1, 16, 130>}, {transform_indices = @transform_1, window_bounds = array<i64: 8, 48>}, {transform_indices = @transform_2, window_bounds = array<i64: 8, 48>}, {transform_indices = @transform_3, window_bounds = array<i64: 8, 1>}, {transform_indices = @transform_4, window_bounds = array<i64: 8, 1>}, {transform_indices = @transform_5, window_bounds = array<i64: 1, 8, 128>}]} {
    %c0 = arith.constant 0 : index
    %c0_0 = arith.constant 0 : index
    %c0_1 = arith.constant 0 : index
    %c0_2 = arith.constant 0 : index
    %0 = vector.load %arg3[%c0, %c0_0, %c0_1, %c0_2] : memref<1x1x16x130xbf16, #tpu.memory_space<vmem>>, vector<1x1x16x128xbf16>
    %1 = vector.shape_cast %0 : vector<1x1x16x128xbf16> to vector<16x128xbf16>
    %c0_3 = arith.constant 0 : index
    %c0_4 = arith.constant 0 : index
    %2 = vector.load %arg9[%c0_3, %c0_4] : memref<48x128xbf16, #tpu.memory_space<vmem>>, vector<16x128xbf16>
    tpu.vector_store %arg9[%c0_3, %c0_4], %1 {strides = array<i32>} : memref<48x128xbf16, #tpu.memory_space<vmem>>, vector<16x128xbf16>,
    %c0_5 = arith.constant 0 : index
    %c0_6 = arith.constant 0 : index
    %c0_7 = arith.constant 0 : index
    %c1 = arith.constant 1 : index
    %3 = vector.load %arg3[%c0_5, %c0_6, %c0_7, %c1] : memref<1x1x16x130xbf16, #tpu.memory_space<vmem>>, vector<1x1x16x128xbf16>
    %4 = vector.shape_cast %3 : vector<1x1x16x128xbf16> to vector<16x128xbf16>
    %c16 = arith.constant 16 : index
    %c0_8 = arith.constant 0 : index
    %5 = vector.load %arg9[%c16, %c0_8] : memref<48x128xbf16, #tpu.memory_space<vmem>>, vector<16x128xbf16>
    tpu.vector_store %arg9[%c16, %c0_8], %4 {strides = array<i32>} : memref<48x128xbf16, #tpu.memory_space<vmem>>, vector<16x128xbf16>,
    %c0_9 = arith.constant 0 : index
    %c0_10 = arith.constant 0 : index
    %c0_11 = arith.constant 0 : index
    %c2 = arith.constant 2 : index
    %6 = vector.load %arg3[%c0_9, %c0_10, %c0_11, %c2] : memref<1x1x16x130xbf16, #tpu.memory_space<vmem>>, vector<1x1x16x128xbf16>
    %7 = vector.shape_cast %6 : vector<1x1x16x128xbf16> to vector<16x128xbf16>
    %c32 = arith.constant 32 : index
    %c0_12 = arith.constant 0 : index
    %8 = vector.load %arg9[%c32, %c0_12] : memref<48x128xbf16, #tpu.memory_space<vmem>>, vector<16x128xbf16>
    tpu.vector_store %arg9[%c32, %c0_12], %7 {strides = array<i32>} : memref<48x128xbf16, #tpu.memory_space<vmem>>, vector<16x128xbf16>,
    %c0_13 = arith.constant 0 : index
    %c0_14 = arith.constant 0 : index
    %9 = vector.load %arg9[%c0_13, %c0_14] : memref<48x128xbf16, #tpu.memory_space<vmem>>, vector<48x128xbf16>
    %c0_15 = arith.constant 0 : index
    %c0_16 = arith.constant 0 : index
    %10 = vector.load %arg4[%c0_15, %c0_16] : memref<8x48xbf16, #tpu.memory_space<vmem>>, vector<8x48xbf16>
    %cst = arith.constant dense<0.000000e+00> : vector<8x128xf32>
    %11 = tpu.matmul %10, %9, %cst {dimension_numbers = #tpu.dot_dimension_numbers<[1], [0], [0], [1], [0, 0, 1, 1], [], []>} : vector<8x48xbf16>, vector<48x128xbf16>, vector<8x128xf32> -> vector<8x128xf32>
    %c0_17 = arith.constant 0 : index
    %c0_18 = arith.constant 0 : index
    %12 = vector.load %arg5[%c0_17, %c0_18] : memref<8x48xbf16, #tpu.memory_space<vmem>>, vector<8x48xbf16>
    %cst_19 = arith.constant dense<0.000000e+00> : vector<8x128xf32>
    %13 = tpu.matmul %12, %9, %cst_19 {dimension_numbers = #tpu.dot_dimension_numbers<[1], [0], [0], [1], [0, 0, 1, 1], [], []>} : vector<8x48xbf16>, vector<48x128xbf16>, vector<8x128xf32> -> vector<8x128xf32>
    %c0_20 = arith.constant 0 : index
    %c0_21 = arith.constant 0 : index
    %14 = vector.load %arg6[%c0_20, %c0_21] : memref<8x1xf32, #tpu.memory_space<vmem>>, vector<8x1xf32>
    %15 = vector.broadcast %14 : vector<8x1xf32> to vector<8x128xf32>
    %16 = arith.addf %11, %15 : vector<8x128xf32>
    %c0_22 = arith.constant 0 : index
    %c0_23 = arith.constant 0 : index
    %17 = vector.load %arg7[%c0_22, %c0_23] : memref<8x1xf32, #tpu.memory_space<vmem>>, vector<8x1xf32>
    %18 = vector.broadcast %17 : vector<8x1xf32> to vector<8x128xf32>
    %19 = arith.addf %13, %18 : vector<8x128xf32>
    %20 = arith.negf %19 : vector<8x128xf32>
    %21 = math.exp %20 : vector<8x128xf32>
    %cst_24 = arith.constant 1.000000e+00 : f32
    %22 = vector.broadcast %cst_24 : f32 to vector<8x128xf32>
    %23 = arith.addf %22, %21 : vector<8x128xf32>
    %24 = arith.divf %22, %23 : vector<8x128xf32>
    %25 = arith.mulf %16, %24 : vector<8x128xf32>
    %c0_25 = arith.constant 0 : index
    %c0_26 = arith.constant 0 : index
    %c0_27 = arith.constant 0 : index
    %26 = vector.load %arg8[%c0_25, %c0_26, %c0_27] : memref<1x8x128xf32, #tpu.memory_space<vmem>>, vector<1x8x128xf32>
    %27 = vector.shape_cast %26 : vector<1x8x128xf32> to vector<8x128xf32>
    %28 = vector.shape_cast %25 : vector<8x128xf32> to vector<1x8x128xf32>
    tpu.vector_store %arg8[%c0_25, %c0_26, %c0_27], %28 {strides = array<i32>} : memref<1x8x128xf32, #tpu.memory_space<vmem>>, vector<1x8x128xf32>,
    return
  }
  func.func @transform_0(%arg0: i32, %arg1: i32, %arg2: i32) -> (i32, i32, i32, i32) {
    %c0_i32 = arith.constant 0 : i32
    %c0_i32_0 = arith.constant 0 : i32
    %c0_i32_1 = arith.constant 0 : i32
    return %arg0, %arg2, %c0_i32, %c0_i32_0 : i32, i32, i32, i32
  }
  func.func @transform_1(%arg0: i32, %arg1: i32, %arg2: i32) -> (i32, i32) {
    %c0_i32 = arith.constant 0 : i32
    %c0_i32_0 = arith.constant 0 : i32
    return %arg1, %c0_i32 : i32, i32
  }
  func.func @transform_2(%arg0: i32, %arg1: i32, %arg2: i32) -> (i32, i32) {
    %c0_i32 = arith.constant 0 : i32
    %c0_i32_0 = arith.constant 0 : i32
    return %arg1, %c0_i32 : i32, i32
  }
  func.func @transform_3(%arg0: i32, %arg1: i32, %arg2: i32) -> (i32, i32) {
    %c0_i32 = arith.constant 0 : i32
    %c0_i32_0 = arith.constant 0 : i32
    return %arg1, %c0_i32 : i32, i32
  }
  func.func @transform_4(%arg0: i32, %arg1: i32, %arg2: i32) -> (i32, i32) {
    %c0_i32 = arith.constant 0 : i32
    %c0_i32_0 = arith.constant 0 : i32
    return %arg1, %c0_i32 : i32, i32
  }
  func.func @transform_5(%arg0: i32, %arg1: i32, %arg2: i32) -> (i32, i32, i32) {
    %c0_i32 = arith.constant 0 : i32
    return %arg0, %arg1, %arg2 : i32, i32, i32
  }
}

</mosaic_0001>

<llo_original>
// kernel: tpu_custom_call.1
$region0: #{tpu_custom_call.1}
  #allocation0 [shape = 'u32[]', space=smem, size = 0x4, offset = 0x4, fixed_abs, tag = 'smem constant byte address 0x4 - core index']
  #allocation1 [shape = 'u32[144,128]{1,0:T(1,128)}', space=vmem, size = 0x12000, scoped, tag = 'internal scratch']
  #allocation2 [shape = 'bf16[48,128]{1,0:T(16,128)(2,1)}', space=vmem, size = 0x3000, scoped, tag = 'scratch operand']
  %s0 = inlined_call_operand.hbm [shape: bf16[2,1,16,130], index: 0, kind: input, shape index: {}]
  %s1 = inlined_call_operand.vmem [shape: bf16[8,48], index: 1, kind: input, shape index: {}]
  %s2 = inlined_call_operand.vmem [shape: bf16[8,48], index: 2, kind: input, shape index: {}]
  %s3 = inlined_call_operand.vmem [shape: f32[8,1], index: 3, kind: input, shape index: {}]
  %s4 = inlined_call_operand.vmem [shape: f32[8,1], index: 4, kind: input, shape index: {}]
  %s5 = inlined_call_operand.hbm [shape: f32[2,8,128], index: 5, kind: output, shape index: {}]
  %s6 = sld [smem:[#allocation0]]
  $region57: #{tpu_custom_call.1} parent=0
    _
  %s8 = ssub.s32 1, %s6
  %s9 = scalar_select 0, %s8, %s6
  $region1: #{tpu_custom_call.1} parent=0
    #allocation3 [shape = 'u8[16384]{0}', space=vmem, size = 0x4000, scoped, tag = 'input window, operand 0']
    #allocation4 [shape = 's32[2]{0}', space=sflag, size = 0x8, scoped, tag = 'scoped memory for tpu_custom_call.1']
    #allocation5 [shape = 's32[2]{0}', space=sflag, size = 0x8, scoped, tag = 'scoped memory for tpu_custom_call.1']
    #allocation6 [shape = 'u8[8192]{0}', space=vmem, size = 0x2000, scoped, tag = 'output window, operand 0']
    %10 = vsyncpa [#allocation4], 0
    %s11 = scalar_lea.sflag [#allocation4], 1
    %12 = vsyncpa %s11, 0
    %13 = vsyncpa [#allocation5], 0
    %s14 = scalar_lea.sflag [#allocation5], 1
    %15 = vsyncpa %s14, 0
    loop: start=0, step=1, limit=4
    $region2: #{tpu_custom_call.1} parent=1 // loop_pre_header
      _
    $region3: #{tpu_custom_call.1} parent=1 // loop_header
      %s17 = sphi 0, %s21
      %p18 = scmp.ge.s32.totalorder %s17, 4
      %s24 = sphi 0, %s43
      %s25 = sphi 0, %s39
      %s26 = sphi 0, %s35
      %s27 = sphi 0, %s24
      %s28 = sphi 0, %s25
      %s29 = sphi 0, %s26
      %s30 = sphi 0, %s27
      %s31 = sphi 0, %s28
      %s32 = sphi 0, %s29
      %s48 = sphi 0, %s50
      %s51 = sphi 0, %s48
      %s52 = sphi 0, %s51
      %s68 = sphi 0, %s52
      %s74 = sphi 0, %s76
      %s77 = sphi 0, %s74
      %s78 = sphi 0, %s77
      %s94 = sphi 0, %s78
      %s100 = sphi 0, %s102
      %s103 = sphi 0, %s100
      %s104 = sphi 0, %s103
      %s120 = sphi 0, %s104
      %s126 = sphi 0, %s128
      %s129 = sphi 0, %s126
      %s130 = sphi 0, %s129
      %s146 = sphi 0, %s130
      %s152 = sphi 0, %s154
      %s155 = sphi 0, %s152
      %s156 = sphi 0, %s155
      %s172 = sphi 0, %s156
      %s182 = sphi 0, %s184
      %s185 = sphi 0, %s182
      %s186 = sphi 0, %s185
      %s202 = sphi 0, %s186
    $region4: #{tpu_custom_call.1} parent=1 // loop_header_branch
      %20 = sbr.rel (%p18) target = $region8
    $region5: #{tpu_custom_call.1} parent=1 // loop_body
      %s22 = ssub.s32 %s17, 1
      %s23 = ssub.s32 %s17, 2
      %s33 = sadd.s32 1, %s26
      %p34 = scmp.ge.s32.totalorder %s33, 1
      %s35 = scalar_select %p34, 0, %s33
      %s36 = sadd.s32 1, %s25
      %s37 = scalar_select %p34, %s36, %s25
      %p38 = scmp.ge.s32.totalorder %s37, 1
      %s39 = scalar_select %p38, 0, %s37
      %s40 = sadd.s32 1, %s24
      %s41 = scalar_select %p38, %s40, %s24
      %p42 = scmp.ge.s32.totalorder %s41, 2
      %s43 = scalar_select %p42, 0, %s41
      %s44 = ssub.s32 %s24, %s43
      %s45 = ssub.s32 %s26, %s35
      %s46 = sor.u32 %s44, %s45
      %p47 = scmp.eq.s32.totalorder %s46, 0
      %s49 = sadd.s32 %s48, 1
      %s50 = scalar_select %p47, %s48, %s49
      %p53 = pneg %p47
      %p54 = scmp.eq.s32.totalorder %s17, 1
      %p55 = por %p53, %p54
      %p56 = scmp.ne.s32.totalorder %s48, %s51
      %p57 = scmp.eq.s32.totalorder %s17, 0
      %p58 = por %p56, %p57
      %p59 = scmp.ne.s32.totalorder %s48, %s51
      %p60 = scmp.eq.s32.totalorder %s22, 1
      %p61 = por %p59, %p60
      %p62 = scmp.ne.s32.totalorder %s51, %s52
      %p63 = scmp.eq.s32.totalorder %s22, 0
      %p64 = por %p62, %p63
      %p65 = scmp.ne.s32.totalorder %s51, %s52
      %p66 = scmp.eq.s32.totalorder %s23, 1
      %p67 = por %p65, %p66
      %p69 = scmp.ne.s32.totalorder %s52, %s68
      %p70 = scmp.eq.s32.totalorder %s23, 0
      %p71 = por %p69, %p70
      %s72 = ssub.s32 %s25, %s39
      %p73 = scmp.eq.s32.totalorder %s72, 0
      %s75 = sadd.s32 %s74, 1
      %s76 = scalar_select %p73, %s74, %s75
      %p79 = pneg %p73
      %p80 = scmp.eq.s32.totalorder %s17, 1
      %p81 = por %p79, %p80
      %p82 = scmp.ne.s32.totalorder %s74, %s77
      %p83 = scmp.eq.s32.totalorder %s17, 0
      %p84 = por %p82, %p83
      %p85 = scmp.ne.s32.totalorder %s74, %s77
      %p86 = scmp.eq.s32.totalorder %s22, 1
      %p87 = por %p85, %p86
      %p88 = scmp.ne.s32.totalorder %s77, %s78
      %p89 = scmp.eq.s32.totalorder %s22, 0
      %p90 = por %p88, %p89
      %p91 = scmp.ne.s32.totalorder %s77, %s78
      %p92 = scmp.eq.s32.totalorder %s23, 1
      %p93 = por %p91, %p92
      %p95 = scmp.ne.s32.totalorder %s78, %s94
      %p96 = scmp.eq.s32.totalorder %s23, 0
      %p97 = por %p95, %p96
      %s98 = ssub.s32 %s25, %s39
      %p99 = scmp.eq.s32.totalorder %s98, 0
      %s101 = sadd.s32 %s100, 1
      %s102 = scalar_select %p99, %s100, %s101
      %p105 = pneg %p99
      %p106 = scmp.eq.s32.totalorder %s17, 1
      %p107 = por %p105, %p106
      %p108 = scmp.ne.s32.totalorder %s100, %s103
      %p109 = scmp.eq.s32.totalorder %s17, 0
      %p110 = por %p108, %p109
      %p111 = scmp.ne.s32.totalorder %s100, %s103
      %p112 = scmp.eq.s32.totalorder %s22, 1
      %p113 = por %p111, %p112
      %p114 = scmp.ne.s32.totalorder %s103, %s104
      %p115 = scmp.eq.s32.totalorder %s22, 0
      %p116 = por %p114, %p115
      %p117 = scmp.ne.s32.totalorder %s103, %s104
      %p118 = scmp.eq.s32.totalorder %s23, 1
      %p119 = por %p117, %p118
      %p121 = scmp.ne.s32.totalorder %s104, %s120
      %p122 = scmp.eq.s32.totalorder %s23, 0
      %p123 = por %p121, %p122
      %s124 = ssub.s32 %s25, %s39
      %p125 = scmp.eq.s32.totalorder %s124, 0
      %s127 = sadd.s32 %s126, 1
      %s128 = scalar_select %p125, %s126, %s127
      %p131 = pneg %p125
      %p132 = scmp.eq.s32.totalorder %s17, 1
      %p133 = por %p131, %p132
      %p134 = scmp.ne.s32.totalorder %s126, %s129
      %p135 = scmp.eq.s32.totalorder %s17, 0
      %p136 = por %p134, %p135
      %p137 = scmp.ne.s32.totalorder %s126, %s129
      %p138 = scmp.eq.s32.totalorder %s22, 1
      %p139 = por %p137, %p138
      %p140 = scmp.ne.s32.totalorder %s129, %s130
      %p141 = scmp.eq.s32.totalorder %s22, 0
      %p142 = por %p140, %p141
      %p143 = scmp.ne.s32.totalorder %s129, %s130
      %p144 = scmp.eq.s32.totalorder %s23, 1
      %p145 = por %p143, %p144
      %p147 = scmp.ne.s32.totalorder %s130, %s146
      %p148 = scmp.eq.s32.totalorder %s23, 0
      %p149 = por %p147, %p148
      %s150 = ssub.s32 %s25, %s39
      %p151 = scmp.eq.s32.totalorder %s150, 0
      %s153 = sadd.s32 %s152, 1
      %s154 = scalar_select %p151, %s152, %s153
      %p157 = pneg %p151
      %p158 = scmp.eq.s32.totalorder %s17, 1
      %p159 = por %p157, %p158
      %p160 = scmp.ne.s32.totalorder %s152, %s155
      %p161 = scmp.eq.s32.totalorder %s17, 0
      %p162 = por %p160, %p161
      %p163 = scmp.ne.s32.totalorder %s152, %s155
      %p164 = scmp.eq.s32.totalorder %s22, 1
      %p165 = por %p163, %p164
      %p166 = scmp.ne.s32.totalorder %s155, %s156
      %p167 = scmp.eq.s32.totalorder %s22, 0
      %p168 = por %p166, %p167
      %p169 = scmp.ne.s32.totalorder %s155, %s156
      %p170 = scmp.eq.s32.totalorder %s23, 1
      %p171 = por %p169, %p170
      %p173 = scmp.ne.s32.totalorder %s156, %s172
      %p174 = scmp.eq.s32.totalorder %s23, 0
      %p175 = por %p173, %p174
      %s176 = ssub.s32 %s24, %s43
      %s177 = ssub.s32 %s25, %s39
      %s178 = sor.u32 %s176, %s177
      %s179 = ssub.s32 %s26, %s35
      %s180 = sor.u32 %s178, %s179
      %p181 = scmp.eq.s32.totalorder %s180, 0
      %s183 = sadd.s32 %s182, 1
      %s184 = scalar_select %p181, %s182, %s183
      %p187 = pneg %p181
      %p188 = scmp.eq.s32.totalorder %s17, 1
      %p189 = por %p187, %p188
      %p190 = scmp.ne.s32.totalorder %s182, %s185
      %p191 = scmp.eq.s32.totalorder %s17, 0
      %p192 = por %p190, %p191
      %p193 = scmp.ne.s32.totalorder %s182, %s185
      %p194 = scmp.eq.s32.totalorder %s22, 1
      %p195 = por %p193, %p194
      %p196 = scmp.ne.s32.totalorder %s185, %s186
      %p197 = scmp.eq.s32.totalorder %s22, 0
      %p198 = por %p196, %p197
      %p199 = scmp.ne.s32.totalorder %s185, %s186
      %p200 = scmp.eq.s32.totalorder %s23, 1
      %p201 = por %p199, %p200
      %p203 = scmp.ne.s32.totalorder %s186, %s202
      %p204 = scmp.eq.s32.totalorder %s23, 0
      %p205 = por %p203, %p204
      %p206 = scmp.le.s32.totalorder 1, %s17
      %p207 = scmp.lt.s32.totalorder %s17, 3
      %p208 = pnand %p206, %p207
      %p209 = pneg %p208
      // Predicated region
      $region9: #{tpu_custom_call.1} parent=5 // pred_check
        _
      $region10: #{tpu_custom_call.1} parent=5 // pred_check_branch
        %211 = sbr.rel (%p208) target = $region12
      $region11: #{tpu_custom_call.1} parent=5 // pred_region
        %s212 = ssub.s32 %s17, 1
        // Predicated region
        $region13: #{tpu_custom_call.1} parent=11 // pred_check
          %p213 = pneg %p90
        $region14: #{tpu_custom_call.1} parent=11 // pred_check_branch
          %215 = sbr.rel (%p213) target = $region16
        $region15: #{tpu_custom_call.1} parent=11 // pred_region
          %p216 = scmp.lt.s32.totalorder %s28, 0
          %s217 = scalar_select %p216, %s28, 0
          %s218 = smul.addr %s217, 4
          %s219 = scalar_lea.vmem %s1, %s218
        $region16: #{tpu_custom_call.1} parent=11 // pred_fallthru
          _
        // Predicated region
        $region17: #{tpu_custom_call.1} parent=11 // pred_check
          %p220 = pneg %p116
        $region18: #{tpu_custom_call.1} parent=11 // pred_check_branch
          %222 = sbr.rel (%p220) target = $region20
        $region19: #{tpu_custom_call.1} parent=11 // pred_region
          %p223 = scmp.lt.s32.totalorder %s28, 0
          %s224 = scalar_select %p223, %s28, 0
          %s225 = smul.addr %s224, 4
          %s226 = scalar_lea.vmem %s2, %s225
        $region20: #{tpu_custom_call.1} parent=11 // pred_fallthru
          _
        // Predicated region
        $region21: #{tpu_custom_call.1} parent=11 // pred_check
          %p227 = pneg %p142
        $region22: #{tpu_custom_call.1} parent=11 // pred_check_branch
          %229 = sbr.rel (%p227) target = $region24
        $region23: #{tpu_custom_call.1} parent=11 // pred_region
          %p230 = scmp.lt.s32.totalorder %s28, 0
          %s231 = scalar_select %p230, %s28, 0
          %s232 = smul.addr %s231, 8
          %s233 = scalar_lea.vmem %s3, %s232
        $region24: #{tpu_custom_call.1} parent=11 // pred_fallthru
          _
        // Predicated region
        $region25: #{tpu_custom_call.1} parent=11 // pred_check
          %p234 = pneg %p168
        $region26: #{tpu_custom_call.1} parent=11 // pred_check_branch
          %236 = sbr.rel (%p234) target = $region28
        $region27: #{tpu_custom_call.1} parent=11 // pred_region
          %p237 = scmp.lt.s32.totalorder %s28, 0
          %s238 = scalar_select %p237, %s28, 0
          %s239 = smul.addr %s238, 8
          %s240 = scalar_lea.vmem %s4, %s239
        $region28: #{tpu_custom_call.1} parent=11 // pred_fallthru
          _
      $region12: #{tpu_custom_call.1} parent=5 // pred_fallthru
        _
      %p241 = scmp.lt.s32.totalorder %s17, 2
      // Predicated region
      $region29: #{tpu_custom_call.1} parent=5 // pred_check
        %p242 = pneg %p241
      $region30: #{tpu_custom_call.1} parent=5 // pred_check_branch
        %244 = sbr.rel (%p242) target = $region32
      $region31: #{tpu_custom_call.1} parent=5 // pred_region
        // Predicated region
        $region33: #{tpu_custom_call.1} parent=31 // pred_check
          %p245 = pneg %p58
        $region34: #{tpu_custom_call.1} parent=31 // pred_check_branch
          %247 = sbr.rel (%p245) target = $region36
        $region35: #{tpu_custom_call.1} parent=31 // pred_region
          %s248 = sand.u32 %s48, 1
          %s249 = scalar_lea.sflag [#allocation4], %s248
          %s250 = sand.u32 %s48, 1
          %s251 = smul.addr %s250, 16
          %s252 = scalar_lea.vmem [#allocation3], %s251
          %s254 = ssub.s32 256, 256
          %255 = vsyncadd %s249, %s254
          %s256 = smul.addr %s26, 4
          %s257 = smul.addr %s24, 4
          %s258 = sadd.s32 %s256, %s257
          %s259 = smul.addr %s258, 64
          %s260 = scalar_lea.hbm %s0, %s259
          %s261 = sshll.u32 %s252, 4
          %s262 = int_to_ptr.vmem [resolvable:$true] %s261
          %267 = dma.hbm_to_vmem [thread:$0]  %s260, 256, %s262, %s249, 128, 128, 8
        $region36: #{tpu_custom_call.1} parent=31 // pred_fallthru
          _
      $region32: #{tpu_custom_call.1} parent=5 // pred_fallthru
        _
      %p268 = scmp.le.s32.totalorder 1, %s17
      %p269 = scmp.lt.s32.totalorder %s17, 3
      %p270 = pnand %p268, %p269
      %p271 = pneg %p270
      // Predicated region
      $region37: #{tpu_custom_call.1} parent=5 // pred_check
        _
      $region38: #{tpu_custom_call.1} parent=5 // pred_check_branch
        %273 = sbr.rel (%p270) target = $region40
      $region39: #{tpu_custom_call.1} parent=5 // pred_region
        %s274 = ssub.s32 %s17, 1
        %s275 = sand.u32 %s51, 1
        %s276 = scalar_lea.sflag [#allocation4], %s275
        %s277 = sand.u32 %s51, 1
        %s278 = smul.addr %s277, 16
        %s279 = scalar_lea.vmem [#allocation3], %s278
        // Predicated region
        $region41: #{tpu_custom_call.1} parent=39 // pred_check
          %p280 = pneg %p64
        $region42: #{tpu_custom_call.1} parent=39 // pred_check_branch
          %282 = sbr.rel (%p280) target = $region44
        $region43: #{tpu_custom_call.1} parent=39 // pred_region
          %283 = dma.done %s276, 256
        $region44: #{tpu_custom_call.1} parent=39 // pred_fallthru
          _
        %s284 = sand.u32 %s51, 1
        %s285 = scalar_lea.sflag [#allocation4], %s284
        %s286 = sand.u32 %s51, 1
        %s287 = smul.addr %s286, 16
        %s288 = scalar_lea.vmem [#allocation3], %s287
        %p289 = pneg %p64
        %p290 = pneg %p61
        %p291 = scmp.lt.s32.totalorder %s28, 0
        %s292 = scalar_select %p291, %s28, 0
        %s293 = smul.addr %s292, 4
        %s294 = scalar_lea.vmem %s1, %s293
        %p295 = pneg %p90
        %p296 = pneg %p87
        %p297 = scmp.lt.s32.totalorder %s28, 0
        %s298 = scalar_select %p297, %s28, 0
        %s299 = smul.addr %s298, 4
        %s300 = scalar_lea.vmem %s2, %s299
        %p301 = pneg %p116
        %p302 = pneg %p113
        %p303 = scmp.lt.s32.totalorder %s28, 0
        %s304 = scalar_select %p303, %s28, 0
        %s305 = smul.addr %s304, 8
        %s306 = scalar_lea.vmem %s3, %s305
        %p307 = pneg %p142
        %p308 = pneg %p139
        %p309 = scmp.lt.s32.totalorder %s28, 0
        %s310 = scalar_select %p309, %s28, 0
        %s311 = smul.addr %s310, 8
        %s312 = scalar_lea.vmem %s4, %s311
        %p313 = pneg %p168
        %p314 = pneg %p165
        %p315 = pneg %p198
        %p316 = pneg %p195
        %s317 = sand.u32 %s185, 1
        %s318 = scalar_lea.sflag [#allocation5], %s317
        %s319 = sand.u32 %s185, 1
        %s320 = smul.addr %s319, 8
        %s321 = scalar_lea.vmem [#allocation6], %s320
        %p322 = scmp.lt.s32.totalorder %s28, 0
        %s323 = scalar_select %p322, %s28, 0
        %s324 = smul.addr %s323, 4
        %s325 = scalar_lea.vmem %s1, %s324
        %p326 = scmp.lt.s32.totalorder %s28, 0
        %s327 = scalar_select %p326, %s28, 0
        %s328 = smul.addr %s327, 4
        %s329 = scalar_lea.vmem %s2, %s328
        %p330 = scmp.lt.s32.totalorder %s28, 0
        %s331 = scalar_select %p330, %s28, 0
        %s332 = smul.addr %s331, 8
        %s333 = scalar_lea.vmem %s3, %s332
        %p334 = scmp.lt.s32.totalorder %s28, 0
        %s335 = scalar_select %p334, %s28, 0
        %s336 = smul.addr %s335, 8
        %s337 = scalar_lea.vmem %s4, %s336
        %v339 = vld [vmem:[%s279] sm:$0xf]
        %v340 = vld [vmem:[%s279 + $0x8] sm:$0xf]
        %v343 = vunpack.c.l.b16 %v339
        %v344 = vunpack.c.l.b16 %v340
        %v345 = vpack.c.b16 %v344, %v343
        %347 = vst [vmem:[#allocation2] sm:$0xff] %v345
        %v348 = vld [vmem:[%s279] sm:$0xff]
        %v349 = vld [vmem:[%s279 + $0x8] sm:$0xff]
        %v352 = vunpack.c.l.b16 %v348
        %v353 = vunpack.c.h.b16 %v348
        %v354 = vunpack.c.l.b16 %v349
        %v355 = vunpack.c.h.b16 %v349
        %v356 = vpack.c.b16 %v354, %v352
        %v357 = vpack.c.b16 %v355, %v353
        %358 = vrot.lane.b32.xlu0 %v356, 127
        %v359 = vpop.permute.xlu0 %358
        %360 = vrot.lane.b32.xlu0 %v357, 127
        %v361 = vpop.permute.xlu0 %360
        %vm362 = vcmask 1039360
        %v363 = vsel %vm362, %v359, %v361
        %365 = vst [vmem:[#allocation2 + $0x8] sm:$0xff] %v363
        %v366 = vld [vmem:[%s279] sm:$0xff]
        %v367 = vld [vmem:[%s279 + $0x8] sm:$0xff]
        %v370 = vunpack.c.l.b16 %v366
        %v371 = vunpack.c.h.b16 %v366
        %v372 = vunpack.c.l.b16 %v367
        %v373 = vunpack.c.h.b16 %v367
        %v374 = vpack.c.b16 %v372, %v370
        %v375 = vpack.c.b16 %v373, %v371
        %376 = vrot.lane.b32.xlu0 %v374, 126
        %v377 = vpop.permute.xlu0 %376
        %378 = vrot.lane.b32.xlu0 %v375, 126
        %v379 = vpop.permute.xlu0 %378
        %vm380 = vcmask 1031168
        %v381 = vsel %vm380, %v377, %v379
        %383 = vst [vmem:[#allocation2 + $0x10] sm:$0xff] %v381
        %v384 = vld [vmem:[#allocation2] sm:$0xff]
        %v385 = vld [vmem:[#allocation2 + $0x8] sm:$0xff]
        %v386 = vld [vmem:[#allocation2 + $0x10] sm:$0xff]
        %v387 = vld [vmem:[%s325] sm:$0xf]
        %v388 = vld [vmem:[%s329] sm:$0xf]
        %v389 = vld [vmem:[%s333] sm:$0xff]
        %391 = vset.pattern.permute.xlu0 0
        %392 = vperm.xlu0 %391, %v389
        %v393 = vpop.permute.xlu0 %392
        %vm395 = vcmask 392192
        %v397 = vsel %vm395, %v387, 0
        %399 = vmatprep.subr.bf16.mxu0 0
        %400 = vmatpush1.bf16.msra.mxu0 %v384
        %401 = vmatprep.subr.bf16.mxu0 0
        %402 = vmatpush1.bf16.msra.mxu0 %v385
        %403 = vmatprep.subr.bf16.mxu0 0
        %404 = vmatpush1.bf16.msra.mxu0 %v386
        %405 = vmatprep.subr.bf16.mxu0 0
        %406 = vmatpush1.bf16.msra.mxu0 0
        %407 = vmatprep.subr.bf16.mxu0 0
        %408 = vmatpush1.bf16.msra.mxu0 0
        %409 = vmatprep.subr.bf16.mxu0 0
        %410 = vmatpush1.bf16.msra.mxu0 0
        %411 = vmatprep.subr.bf16.mxu0 0
        %412 = vmatpush1.bf16.msra.mxu0 0
        %413 = vmatprep.subr.bf16.mxu0 0
        %414 = vmatpush1.bf16.msra.mxu0 0
        %415 = vmatprep.subr.bf16.mxu0 0
        %416 = vmatpush1.bf16.msra.mxu0 0
        %417 = vmatprep.subr.bf16.mxu0 0
        %418 = vmatpush1.bf16.msra.mxu0 0
        %419 = vmatprep.subr.bf16.mxu0 0
        %420 = vmatpush1.bf16.msra.mxu0 0
        %421 = vmatprep.subr.bf16.mxu0 0
        %422 = vmatpush1.bf16.msra.mxu0 0
        %423 = vmatprep.subr.bf16.mxu0 0
        %424 = vmatpush1.bf16.msra.mxu0 0
        %425 = vmatprep.subr.bf16.mxu0 0
        %426 = vmatpush1.bf16.msra.mxu0 0
        %427 = vmatprep.subr.bf16.mxu0 0
        %428 = vmatpush1.bf16.msra.mxu0 0
        %429 = vmatprep.subr.bf16.mxu0 0
        %430 = vmatpush1.bf16.msra.mxu0 0
        %431 = vmatprep.mubr.bf16.mxu0 0
        %432 = vmatmul.mubr.bf16.gmra.mrb[0].mxu0 %v397
        %v433 = vpop.f32.mrb[0].mxu0
        %v434 = vadd.f32 %v393, %v433
        %v435 = vpop.f32.mrb[0].mxu0
        %v436 = vpop.f32.mrb[0].mxu0
        %v437 = vpop.f32.mrb[0].mxu0
        %438 = vdwg.mxu0
        %v439 = vld [vmem:[%s337] sm:$0xff]
        %441 = vset.pattern.permute.xlu0 0
        %442 = vperm.xlu0 %441, %v439
        %v443 = vpop.permute.xlu0 %442
        %v446 = vsel %vm395, %v388, 0
        %448 = vmatprep.subr.bf16.mxu0 0
        %449 = vmatpush1.bf16.msra.mxu0 %v384
        %450 = vmatprep.subr.bf16.mxu0 0
        %451 = vmatpush1.bf16.msra.mxu0 %v385
        %452 = vmatprep.subr.bf16.mxu0 0
        %453 = vmatpush1.bf16.msra.mxu0 %v386
        %454 = vmatprep.subr.bf16.mxu0 0
        %455 = vmatpush1.bf16.msra.mxu0 0
        %456 = vmatprep.subr.bf16.mxu0 0
        %457 = vmatpush1.bf16.msra.mxu0 0
        %458 = vmatprep.subr.bf16.mxu0 0
        %459 = vmatpush1.bf16.msra.mxu0 0
        %460 = vmatprep.subr.bf16.mxu0 0
        %461 = vmatpush1.bf16.msra.mxu0 0
        %462 = vmatprep.subr.bf16.mxu0 0
        %463 = vmatpush1.bf16.msra.mxu0 0
        %464 = vmatprep.subr.bf16.mxu0 0
        %465 = vmatpush1.bf16.msra.mxu0 0
        %466 = vmatprep.subr.bf16.mxu0 0
        %467 = vmatpush1.bf16.msra.mxu0 0
        %468 = vmatprep.subr.bf16.mxu0 0
        %469 = vmatpush1.bf16.msra.mxu0 0
        %470 = vmatprep.subr.bf16.mxu0 0
        %471 = vmatpush1.bf16.msra.mxu0 0
        %472 = vmatprep.subr.bf16.mxu0 0
        %473 = vmatpush1.bf16.msra.mxu0 0
        %474 = vmatprep.subr.bf16.mxu0 0
        %475 = vmatpush1.bf16.msra.mxu0 0
        %476 = vmatprep.subr.bf16.mxu0 0
        %477 = vmatpush1.bf16.msra.mxu0 0
        %478 = vmatprep.subr.bf16.mxu0 0
        %479 = vmatpush1.bf16.msra.mxu0 0
        %480 = vmatprep.mubr.bf16.mxu0 0
        %481 = vmatmul.mubr.bf16.gmra.mrb[0].mxu0 %v446
        %v482 = vpop.f32.mrb[0].mxu0
        %v483 = vadd.f32 %v443, %v482
        %v484 = vpop.f32.mrb[0].mxu0
        %v485 = vpop.f32.mrb[0].mxu0
        %v486 = vpop.f32.mrb[0].mxu0
        %487 = vdwg.mxu0
        %v488 = vxor.u32 %v483, 2147483648
        %v489 = vmul.f32 %v488, 1.442695
        %v490 = vpow.pop %v489
        %v491 = vadd.f32 %v490, 1.0
        %v492 = vrcp.pop %v491
        %v493 = vmul.f32 1.0, %v492
        %v494 = vmul.f32 %v434, %v493
        %495 = vst [vmem:[%s321] sm:$0xff] %v494
        %s496 = sand.u32 %s185, 1
        %s497 = scalar_lea.sflag [#allocation5], %s496
        %s498 = sand.u32 %s185, 1
        %s499 = smul.addr %s498, 8
        %s500 = scalar_lea.vmem [#allocation6], %s499
        // Predicated region
        $region45: #{tpu_custom_call.1} parent=39 // pred_check
          %p501 = pneg %p195
        $region46: #{tpu_custom_call.1} parent=39 // pred_check_branch
          %503 = sbr.rel (%p501) target = $region48
        $region47: #{tpu_custom_call.1} parent=39 // pred_region
          %s505 = ssub.s32 128, 128
          %506 = vsyncadd %s497, %s505
          %s507 = sadd.s32 %s29, %s28
          %s508 = sadd.s32 %s507, %s27
          %s509 = smul.addr %s508, 128
          %s510 = scalar_lea.hbm %s5, %s509
          %s512 = sshll.u32 %s500, 4
          %s513 = int_to_ptr.vmem [resolvable:$true] %s512
          %515 = dma.vmem_to_hbm [thread:$0]  %s513, 128, %s510, %s497
        $region48: #{tpu_custom_call.1} parent=39 // pred_fallthru
          _
      $region40: #{tpu_custom_call.1} parent=5 // pred_fallthru
        _
      %p516 = scmp.le.s32.totalorder 2, %s17
      // Predicated region
      $region49: #{tpu_custom_call.1} parent=5 // pred_check
        %p517 = pneg %p516
      $region50: #{tpu_custom_call.1} parent=5 // pred_check_branch
        %519 = sbr.rel (%p517) target = $region52
      $region51: #{tpu_custom_call.1} parent=5 // pred_region
        %s520 = ssub.s32 %s17, 2
        // Predicated region
        $region53: #{tpu_custom_call.1} parent=51 // pred_check
          %p521 = pneg %p201
        $region54: #{tpu_custom_call.1} parent=51 // pred_check_branch
          %523 = sbr.rel (%p521) target = $region56
        $region55: #{tpu_custom_call.1} parent=51 // pred_region
          %s524 = sand.u32 %s186, 1
          %s525 = scalar_lea.sflag [#allocation5], %s524
          %s526 = sand.u32 %s186, 1
          %s527 = smul.addr %s526, 8
          %s528 = scalar_lea.vmem [#allocation6], %s527
          %529 = dma.done %s525, 128
        $region56: #{tpu_custom_call.1} parent=51 // pred_fallthru
          _
      $region52: #{tpu_custom_call.1} parent=5 // pred_fallthru
        _
    $region6: #{tpu_custom_call.1} parent=1 // loop_footer
      %s21 = sadd.s32 1, %s17
    $region7: #{tpu_custom_call.1} parent=1 // loop_footer_branch
      %16 = sbr.rel target = $region3
    $region8: #{tpu_custom_call.1} parent=1 // loop_exit
      _
    %530 = vsyncpa [#allocation4], 1
    %s531 = scalar_lea.sflag [#allocation4], 1
    %532 = vsyncpa %s531, 1
    %533 = vsyncpa [#allocation5], 1
    %s534 = scalar_lea.sflag [#allocation5], 1
    %535 = vsyncpa %s534, 1

</llo_original>
